<compile_context>
chip_gen: v6e
topology: v6e:2x2x1
jax: 0.10.0
libtpu: 0.0.40
codegen_flags: <defaults>
</compile_context>

<pallas_src>
import functools

import jax
import jax.numpy as jnp
from jax.experimental import pallas as pl
from jax.experimental.pallas import tpu as pltpu


def _round_up(x, m):
    return -(-x // m) * m


def _generator_kernel(x_ref, w0_ref, w1_ref, w2_ref, gb01_ref, gb2_ref, o_ref,
                      *, n_hidden, n_out, eps=1e-5):
    """Fully fused Generator forward on one batch tile.

    x_ref:    (TB, Lp)  f32 noise tile (features zero-padded to Lp)
    w0_ref:   (Lp, Lp)  bf16 layer_0 weight (pre-transposed, zero-padded)
    w1_ref:   (Lp, Lp)  bf16 layer_1 weight
    w2_ref:   (Lp, Dp)  bf16 layer_2 weight
    gb01_ref: (4, Lp)   f32 rows = [gamma0, beta0, gamma1, beta1] (zero-padded)
    gb2_ref:  (2, Dp)   f32 rows = [gamma2, beta2] (zero-padded)
    o_ref:    (TB, Dp)  f32 output tile

    Zero-padded weight columns + zero gamma/beta keep every padded lane exactly
    0 through LN/tanh/residual, so only the LN divisor needs the true count.
    """
    x = x_ref[...].astype(jnp.float32)
    gb01 = gb01_ref[...].astype(jnp.float32)
    gb2 = gb2_ref[...].astype(jnp.float32)

    def ln_tanh(h, g, b, inv_n):
        # Single-pass LayerNorm over the feature (lane) axis:
        # fused sum / sum-of-squares, var = E[h^2] - mean^2, then affine + tanh.
        s1 = jnp.sum(h, axis=-1, keepdims=True)
        s2 = jnp.sum(h * h, axis=-1, keepdims=True)
        mean = s1 * inv_n
        var = jnp.maximum(s2 * inv_n - mean * mean, 0.0)
        return jnp.tanh((h - mean) * jax.lax.rsqrt(var + eps) * g + b)

    inv_h = jnp.float32(1.0 / n_hidden)
    inv_o = jnp.float32(1.0 / n_out)

    # Block 0: Linear(bias=False) -> LayerNorm -> Tanh, + residual.
    h0 = jnp.dot(x.astype(jnp.bfloat16), w0_ref[...],
                 preferred_element_type=jnp.float32)
    h0 = ln_tanh(h0, gb01[0:1, :], gb01[1:2, :], inv_h) + x

    # Block 1: same, + residual.
    h1 = jnp.dot(h0.astype(jnp.bfloat16), w1_ref[...],
                 preferred_element_type=jnp.float32)
    h1 = ln_tanh(h1, gb01[2:3, :], gb01[3:4, :], inv_h) + h0

    # Block 2: no residual.
    out = jnp.dot(h1.astype(jnp.bfloat16), w2_ref[...],
                  preferred_element_type=jnp.float32)
    out = ln_tanh(out, gb2[0:1, :], gb2[1:2, :], inv_o)

    o_ref[...] = out.astype(o_ref.dtype)


def _choose_batch_tile(B, *, max_tile=256):
    """Batch-tile rows: multiple of 8, minimal padding, >=2 tiles when possible.

    * n_tiles = ceil(B / max_tile), TB = round_up(ceil(B / n_tiles), 8) keeps
      padding under 8 rows per tile (avoids near-50%-padding tiles for awkward B).
    * For B >= 16 we force at least 2 tiles so the "parallel" batch axis can
      shard across v7x's two TensorCores (no effect on single-TC v5e/v6e).
    * max_tile defaults to 256 to bound vreg/spill pressure from the three
      simultaneously-live (TB, Lp) f32 activations; sweep 256-1024 for large
      mem-bound batches with small Lp.
    """
    n_tiles = -(-B // max_tile)
    if n_tiles < 2 and B >= 16:
        n_tiles = 2
    tb = -(-B // n_tiles)
    return max(8, _round_up(tb, 8))


def _vmem_limit_bytes(TB, Lp, Dp):
    w_bytes = (2 * Lp * Lp + Lp * Dp) * 2            # bf16 weights, Buffered(1)
    gb_bytes = (4 * Lp + 2 * Dp) * 4
    act_bytes = 2 * TB * Lp * 4 + 2 * TB * Dp * 4    # double-buffered in/out tiles
    est = 2 * (w_bytes + gb_bytes + act_bytes) + (4 << 20)   # 2x headroom + 4 MiB
    # Clamp to [32 MiB, 64 MiB]: 32 MiB exceeds every chip's default scoped
    # limit (v5e default is only 16 MiB); 64 MiB = v7x physical VMEM.
    return int(min(max(est, 32 << 20), 64 << 20))


def _pad_to(a, shape):
    widths = tuple((0, t - s) for s, t in zip(a.shape, shape))
    if all(w == (0, 0) for w in widths):
        return a
    return jnp.pad(a, widths)


def generator_forward(noise, params, *, max_batch_tile=256):
    """Single fused pallas_call over batch tiles.

    noise: (B, L) f32. Returns (B, Dout) f32.
    """
    B, L = noise.shape
    Dout = params["w2"].shape[1]

    # Lane-dense feature/output dims (multiples of 128).
    Lp = _round_up(L, 128)
    Dp = _round_up(Dout, 128)

    TB = _choose_batch_tile(B, max_tile=max_batch_tile)
    pad_b = (-B) % TB
    Bp = B + pad_b

    x = _pad_to(noise.astype(jnp.float32), (Bp, Lp))

    # Weights pre-transposed to (in, out), zero-padded, cast to bf16 for the MXU.
    w0 = _pad_to(params["w0"], (Lp, Lp)).astype(jnp.bfloat16)
    w1 = _pad_to(params["w1"], (Lp, Lp)).astype(jnp.bfloat16)
    w2 = _pad_to(params["w2"], (Lp, Dp)).astype(jnp.bfloat16)

    # LayerNorm affine params packed into two small resident f32 arrays;
    # zero-padded lanes force padded features to exactly 0 after tanh.
    gb01 = _pad_to(
        jnp.concatenate(
            [params["g0"], params["b0"], params["g1"], params["b1"]], axis=0),
        (4, Lp))
    gb2 = _pad_to(jnp.concatenate([params["g2"], params["b2"]], axis=0), (2, Dp))

    kernel = functools.partial(_generator_kernel, n_hidden=L, n_out=Dout)

    # Constant index_map -> weights/affine params are resident; one buffer only.
    resident = pl.Buffered(1)

    out = pl.pallas_call(
        kernel,
        out_shape=jax.ShapeDtypeStruct((Bp, Dp), jnp.float32),
        grid_spec=pltpu.PrefetchScalarGridSpec(
            num_scalar_prefetch=0,
            grid=(Bp // TB,),
            in_specs=[
                pl.BlockSpec((TB, Lp), lambda i: (i, 0)),   # noise tile (pipelined)
                pl.BlockSpec((Lp, Lp), lambda i: (0, 0), pipeline_mode=resident),
                pl.BlockSpec((Lp, Lp), lambda i: (0, 0), pipeline_mode=resident),
                pl.BlockSpec((Lp, Dp), lambda i: (0, 0), pipeline_mode=resident),
                pl.BlockSpec((4, Lp), lambda i: (0, 0), pipeline_mode=resident),
                pl.BlockSpec((2, Dp), lambda i: (0, 0), pipeline_mode=resident),
            ],
            out_specs=pl.BlockSpec((TB, Dp), lambda i: (i, 0)),
        ),
        compiler_params=pltpu.CompilerParams(
            dimension_semantics=("parallel",),
            vmem_limit_bytes=_vmem_limit_bytes(TB, Lp, Dp)),
    )(x, w0, w1, w2, gb01, gb2)

    # TODO(synk): once resident bf16 weights approach ~half of v7x's 64 MiB VMEM
    # (latent_dim ~3-4K), switch to a trailing "arbitrary" K-reduction grid axis
    # with an f32 accumulator scratch instead of fully resident weights.
    return out[:B, :Dout]


def init_params(key, latent_dim, output_dim):
    """Deterministic synthetic parameters matching the module's shapes."""
    ks = jax.random.split(key, 6)
    scale = 1.0 / jnp.sqrt(jnp.float32(latent_dim))

    def linear_w(k, din, dout):
        # stored pre-transposed: (in, out)
        return jax.random.normal(k, (din, dout), jnp.float32) * scale

    return {
        "w0": linear_w(ks[0], latent_dim, latent_dim),
        "g0": 1.0 + 0.1 * jax.random.normal(ks[1], (1, latent_dim), jnp.float32),
        "b0": 0.1 * jax.random.normal(ks[2], (1, latent_dim), jnp.float32),
        "w1": linear_w(ks[3], latent_dim, latent_dim),
        "g1": jnp.ones((1, latent_dim), jnp.float32),
        "b1": jnp.zeros((1, latent_dim), jnp.float32),
        "w2": linear_w(ks[4], latent_dim, output_dim),
        "g2": 1.0 + 0.1 * jax.random.normal(ks[5], (1, output_dim), jnp.float32),
        "b2": jnp.zeros((1, output_dim), jnp.float32),
    }


def _reference_forward(noise, params, eps=1e-5, matmul_dtype=jnp.float32):
    """Pure-JAX reference. matmul_dtype=bf16 mirrors the kernel's MXU feed."""
    def block(x, w, g, b, residual):
        h = jnp.dot(x.astype(matmul_dtype), w.astype(matmul_dtype),
                    preferred_element_type=jnp.float32)
        mean = jnp.mean(h, axis=-1, keepdims=True)
        var = jnp.mean((h - mean) ** 2, axis=-1, keepdims=True)
        h = (h - mean) / jnp.sqrt(var + eps)
        h = jnp.tanh(h * g + b)
        return h + x if residual else h

    h = block(noise, params["w0"], params["g0"], params["b0"], True)
    h = block(h, params["w1"], params["g1"], params["b1"], True)
    return block(h, params["w2"], params["g2"], params["b2"], False)


if __name__ == "__main__":
    batch = 8
    latent_dim = 32
    output_dim = 16

    key = jax.random.PRNGKey(0)
    k_noise, k_params = jax.random.split(key)

    noise = jax.random.normal(k_noise, (batch, latent_dim), jnp.float32)
    params = init_params(k_params, latent_dim, output_dim)

    fwd = jax.jit(generator_forward)
    out = jax.block_until_ready(fwd(noise, params))

    assert out.shape == (batch, output_dim)

    # Tight check vs a reference that mirrors the kernel's bf16 matmul operands.
    ref_bf16 = _reference_forward(noise, params, matmul_dtype=jnp.bfloat16)
    assert jnp.allclose(out, ref_bf16, atol=1e-3, rtol=1e-3), \
        "mismatch vs bf16-matmul JAX reference"

    # Looser check vs the full-f32 module math (difference = bf16 MXU rounding).
    ref_f32 = _reference_forward(noise, params, matmul_dtype=jnp.float32)
    assert jnp.allclose(out, ref_f32, atol=5e-2, rtol=5e-2), \
        "mismatch vs f32 JAX reference"

    print("KERNEL_OK")
</pallas_src>

<mosaic_0001>
module attributes {stable_mosaic.version = 11 : i64} {
  func.func @_generator_kernel(%arg0: i32, %arg1: memref<8x128xf32, #tpu.memory_space<vmem>>, %arg2: memref<128x128xbf16, #tpu.memory_space<vmem>>, %arg3: memref<128x128xbf16, #tpu.memory_space<vmem>>, %arg4: memref<128x128xbf16, #tpu.memory_space<vmem>>, %arg5: memref<4x128xf32, #tpu.memory_space<vmem>>, %arg6: memref<2x128xf32, #tpu.memory_space<vmem>>, %arg7: memref<8x128xf32, #tpu.memory_space<vmem>>) attributes {dimension_semantics = [#tpu.dimension_semantics<parallel>], iteration_bounds = array<i64: 1>, scalar_prefetch = 0 : i64, scratch_operands = 0 : i64, tpu.core_type = #tpu.core_type<tc>, window_params = [{transform_indices = @transform_0, window_bounds = array<i64: 8, 128>}, {pipeline_mode = #tpu.pipeline_mode<synchronous>, transform_indices = @transform_1, window_bounds = array<i64: 128, 128>}, {pipeline_mode = #tpu.pipeline_mode<synchronous>, transform_indices = @transform_2, window_bounds = array<i64: 128, 128>}, {pipeline_mode = #tpu.pipeline_mode<synchronous>, transform_indices = @transform_3, window_bounds = array<i64: 128, 128>}, {pipeline_mode = #tpu.pipeline_mode<synchronous>, transform_indices = @transform_4, window_bounds = array<i64: 4, 128>}, {pipeline_mode = #tpu.pipeline_mode<synchronous>, transform_indices = @transform_5, window_bounds = array<i64: 2, 128>}, {transform_indices = @transform_6, window_bounds = array<i64: 8, 128>}]} {
    %c0 = arith.constant 0 : index
    %c0_0 = arith.constant 0 : index
    %0 = vector.load %arg1[%c0, %c0_0] : memref<8x128xf32, #tpu.memory_space<vmem>>, vector<8x128xf32>
    %c0_1 = arith.constant 0 : index
    %c0_2 = arith.constant 0 : index
    %1 = vector.load %arg5[%c0_1, %c0_2] : memref<4x128xf32, #tpu.memory_space<vmem>>, vector<4x128xf32>
    %c0_3 = arith.constant 0 : index
    %c0_4 = arith.constant 0 : index
    %2 = vector.load %arg6[%c0_3, %c0_4] : memref<2x128xf32, #tpu.memory_space<vmem>>, vector<2x128xf32>
    %3 = arith.truncf %0 : vector<8x128xf32> to vector<8x128xbf16>
    %c0_5 = arith.constant 0 : index
    %c0_6 = arith.constant 0 : index
    %4 = vector.load %arg2[%c0_5, %c0_6] : memref<128x128xbf16, #tpu.memory_space<vmem>>, vector<128x128xbf16>
    %cst = arith.constant dense<0.000000e+00> : vector<8x128xf32>
    %5 = tpu.matmul %3, %4, %cst {dimension_numbers = #tpu.dot_dimension_numbers<[1], [0], [0], [1], [0, 0, 1, 1], [], []>} : vector<8x128xbf16>, vector<128x128xbf16>, vector<8x128xf32> -> vector<8x128xf32>
    %6 = vector.extract_strided_slice %1 {offsets = [0, 0], sizes = [1, 128], strides = [1, 1]} : vector<4x128xf32> to vector<1x128xf32>
    %7 = vector.extract_strided_slice %1 {offsets = [1, 0], sizes = [1, 128], strides = [1, 1]} : vector<4x128xf32> to vector<1x128xf32>
    %cst_7 = arith.constant dense<0.000000e+00> : vector<8xf32>
    %8 = vector.multi_reduction <add>, %5, %cst_7 [1] : vector<8x128xf32> to vector<8xf32>
    %9 = vector.shape_cast %8 : vector<8xf32> to vector<8x1xf32>
    %10 = arith.mulf %5, %5 : vector<8x128xf32>
    %cst_8 = arith.constant dense<0.000000e+00> : vector<8xf32>
    %11 = vector.multi_reduction <add>, %10, %cst_8 [1] : vector<8x128xf32> to vector<8xf32>
    %12 = vector.shape_cast %11 : vector<8xf32> to vector<8x1xf32>
    %cst_9 = arith.constant 3.125000e-02 : f32
    %13 = vector.broadcast %cst_9 : f32 to vector<8x1xf32>
    %14 = arith.mulf %9, %13 : vector<8x1xf32>
    %cst_10 = arith.constant 3.125000e-02 : f32
    %15 = vector.broadcast %cst_10 : f32 to vector<8x1xf32>
    %16 = arith.mulf %12, %15 : vector<8x1xf32>
    %17 = arith.mulf %14, %14 : vector<8x1xf32>
    %18 = arith.subf %16, %17 : vector<8x1xf32>
    %cst_11 = arith.constant 0.000000e+00 : f32
    %19 = vector.broadcast %cst_11 : f32 to vector<8x1xf32>
    %20 = arith.maximumf %18, %19 : vector<8x1xf32>
    %21 = vector.broadcast %14 : vector<8x1xf32> to vector<8x128xf32>
    %22 = arith.subf %5, %21 : vector<8x128xf32>
    %cst_12 = arith.constant 9.99999974E-6 : f32
    %23 = vector.broadcast %cst_12 : f32 to vector<8x1xf32>
    %24 = arith.addf %20, %23 : vector<8x1xf32>
    %25 = math.rsqrt %24 : vector<8x1xf32>
    %26 = vector.broadcast %25 : vector<8x1xf32> to vector<8x128xf32>
    %27 = arith.mulf %22, %26 : vector<8x128xf32>
    %28 = vector.broadcast %6 : vector<1x128xf32> to vector<8x128xf32>
    %29 = arith.mulf %27, %28 : vector<8x128xf32>
    %30 = vector.broadcast %7 : vector<1x128xf32> to vector<8x128xf32>
    %31 = arith.addf %29, %30 : vector<8x128xf32>
    %32 = math.tanh %31 : vector<8x128xf32>
    %33 = arith.addf %32, %0 : vector<8x128xf32>
    %34 = arith.truncf %33 : vector<8x128xf32> to vector<8x128xbf16>
    %c0_13 = arith.constant 0 : index
    %c0_14 = arith.constant 0 : index
    %35 = vector.load %arg3[%c0_13, %c0_14] : memref<128x128xbf16, #tpu.memory_space<vmem>>, vector<128x128xbf16>
    %cst_15 = arith.constant dense<0.000000e+00> : vector<8x128xf32>
    %36 = tpu.matmul %34, %35, %cst_15 {dimension_numbers = #tpu.dot_dimension_numbers<[1], [0], [0], [1], [0, 0, 1, 1], [], []>} : vector<8x128xbf16>, vector<128x128xbf16>, vector<8x128xf32> -> vector<8x128xf32>
    %37 = vector.extract_strided_slice %1 {offsets = [2, 0], sizes = [1, 128], strides = [1, 1]} : vector<4x128xf32> to vector<1x128xf32>
    %38 = vector.extract_strided_slice %1 {offsets = [3, 0], sizes = [1, 128], strides = [1, 1]} : vector<4x128xf32> to vector<1x128xf32>
    %cst_16 = arith.constant dense<0.000000e+00> : vector<8xf32>
    %39 = vector.multi_reduction <add>, %36, %cst_16 [1] : vector<8x128xf32> to vector<8xf32>
    %40 = vector.shape_cast %39 : vector<8xf32> to vector<8x1xf32>
    %41 = arith.mulf %36, %36 : vector<8x128xf32>
    %cst_17 = arith.constant dense<0.000000e+00> : vector<8xf32>
    %42 = vector.multi_reduction <add>, %41, %cst_17 [1] : vector<8x128xf32> to vector<8xf32>
    %43 = vector.shape_cast %42 : vector<8xf32> to vector<8x1xf32>
    %cst_18 = arith.constant 3.125000e-02 : f32
    %44 = vector.broadcast %cst_18 : f32 to vector<8x1xf32>
    %45 = arith.mulf %40, %44 : vector<8x1xf32>
    %cst_19 = arith.constant 3.125000e-02 : f32
    %46 = vector.broadcast %cst_19 : f32 to vector<8x1xf32>
    %47 = arith.mulf %43, %46 : vector<8x1xf32>
    %48 = arith.mulf %45, %45 : vector<8x1xf32>
    %49 = arith.subf %47, %48 : vector<8x1xf32>
    %cst_20 = arith.constant 0.000000e+00 : f32
    %50 = vector.broadcast %cst_20 : f32 to vector<8x1xf32>
    %51 = arith.maximumf %49, %50 : vector<8x1xf32>
    %52 = vector.broadcast %45 : vector<8x1xf32> to vector<8x128xf32>
    %53 = arith.subf %36, %52 : vector<8x128xf32>
    %cst_21 = arith.constant 9.99999974E-6 : f32
    %54 = vector.broadcast %cst_21 : f32 to vector<8x1xf32>
    %55 = arith.addf %51, %54 : vector<8x1xf32>
    %56 = math.rsqrt %55 : vector<8x1xf32>
    %57 = vector.broadcast %56 : vector<8x1xf32> to vector<8x128xf32>
    %58 = arith.mulf %53, %57 : vector<8x128xf32>
    %59 = vector.broadcast %37 : vector<1x128xf32> to vector<8x128xf32>
    %60 = arith.mulf %58, %59 : vector<8x128xf32>
    %61 = vector.broadcast %38 : vector<1x128xf32> to vector<8x128xf32>
    %62 = arith.addf %60, %61 : vector<8x128xf32>
    %63 = math.tanh %62 : vector<8x128xf32>
    %64 = arith.addf %63, %33 : vector<8x128xf32>
    %65 = arith.truncf %64 : vector<8x128xf32> to vector<8x128xbf16>
    %c0_22 = arith.constant 0 : index
    %c0_23 = arith.constant 0 : index
    %66 = vector.load %arg4[%c0_22, %c0_23] : memref<128x128xbf16, #tpu.memory_space<vmem>>, vector<128x128xbf16>
    %cst_24 = arith.constant dense<0.000000e+00> : vector<8x128xf32>
    %67 = tpu.matmul %65, %66, %cst_24 {dimension_numbers = #tpu.dot_dimension_numbers<[1], [0], [0], [1], [0, 0, 1, 1], [], []>} : vector<8x128xbf16>, vector<128x128xbf16>, vector<8x128xf32> -> vector<8x128xf32>
    %68 = vector.extract_strided_slice %2 {offsets = [0, 0], sizes = [1, 128], strides = [1, 1]} : vector<2x128xf32> to vector<1x128xf32>
    %69 = vector.extract_strided_slice %2 {offsets = [1, 0], sizes = [1, 128], strides = [1, 1]} : vector<2x128xf32> to vector<1x128xf32>
    %cst_25 = arith.constant dense<0.000000e+00> : vector<8xf32>
    %70 = vector.multi_reduction <add>, %67, %cst_25 [1] : vector<8x128xf32> to vector<8xf32>
    %71 = vector.shape_cast %70 : vector<8xf32> to vector<8x1xf32>
    %72 = arith.mulf %67, %67 : vector<8x128xf32>
    %cst_26 = arith.constant dense<0.000000e+00> : vector<8xf32>
    %73 = vector.multi_reduction <add>, %72, %cst_26 [1] : vector<8x128xf32> to vector<8xf32>
    %74 = vector.shape_cast %73 : vector<8xf32> to vector<8x1xf32>
    %cst_27 = arith.constant 6.250000e-02 : f32
    %75 = vector.broadcast %cst_27 : f32 to vector<8x1xf32>
    %76 = arith.mulf %71, %75 : vector<8x1xf32>
    %cst_28 = arith.constant 6.250000e-02 : f32
    %77 = vector.broadcast %cst_28 : f32 to vector<8x1xf32>
    %78 = arith.mulf %74, %77 : vector<8x1xf32>
    %79 = arith.mulf %76, %76 : vector<8x1xf32>
    %80 = arith.subf %78, %79 : vector<8x1xf32>
    %cst_29 = arith.constant 0.000000e+00 : f32
    %81 = vector.broadcast %cst_29 : f32 to vector<8x1xf32>
    %82 = arith.maximumf %80, %81 : vector<8x1xf32>
    %83 = vector.broadcast %76 : vector<8x1xf32> to vector<8x128xf32>
    %84 = arith.subf %67, %83 : vector<8x128xf32>
    %cst_30 = arith.constant 9.99999974E-6 : f32
    %85 = vector.broadcast %cst_30 : f32 to vector<8x1xf32>
    %86 = arith.addf %82, %85 : vector<8x1xf32>
    %87 = math.rsqrt %86 : vector<8x1xf32>
    %88 = vector.broadcast %87 : vector<8x1xf32> to vector<8x128xf32>
    %89 = arith.mulf %84, %88 : vector<8x128xf32>
    %90 = vector.broadcast %68 : vector<1x128xf32> to vector<8x128xf32>
    %91 = arith.mulf %89, %90 : vector<8x128xf32>
    %92 = vector.broadcast %69 : vector<1x128xf32> to vector<8x128xf32>
    %93 = arith.addf %91, %92 : vector<8x128xf32>
    %94 = math.tanh %93 : vector<8x128xf32>
    %c0_31 = arith.constant 0 : index
    %c0_32 = arith.constant 0 : index
    %95 = vector.load %arg7[%c0_31, %c0_32] : memref<8x128xf32, #tpu.memory_space<vmem>>, vector<8x128xf32>
    tpu.vector_store %arg7[%c0_31, %c0_32], %94 {strides = array<i32>} : memref<8x128xf32, #tpu.memory_space<vmem>>, vector<8x128xf32>,
    return
  }
  func.func @transform_0(%arg0: i32) -> (i32, i32) {
    %c0_i32 = arith.constant 0 : i32
    %c0_i32_0 = arith.constant 0 : i32
    return %arg0, %c0_i32 : i32, i32
  }
  func.func @transform_1(%arg0: i32) -> (i32, i32) {
    %c0_i32 = arith.constant 0 : i32
    %c0_i32_0 = arith.constant 0 : i32
    %c0_i32_1 = arith.constant 0 : i32
    return %c0_i32, %c0_i32_0 : i32, i32
  }
  func.func @transform_2(%arg0: i32) -> (i32, i32) {
    %c0_i32 = arith.constant 0 : i32
    %c0_i32_0 = arith.constant 0 : i32
    %c0_i32_1 = arith.constant 0 : i32
    return %c0_i32, %c0_i32_0 : i32, i32
  }
  func.func @transform_3(%arg0: i32) -> (i32, i32) {
    %c0_i32 = arith.constant 0 : i32
    %c0_i32_0 = arith.constant 0 : i32
    %c0_i32_1 = arith.constant 0 : i32
    return %c0_i32, %c0_i32_0 : i32, i32
  }
  func.func @transform_4(%arg0: i32) -> (i32, i32) {
    %c0_i32 = arith.constant 0 : i32
    %c0_i32_0 = arith.constant 0 : i32
    %c0_i32_1 = arith.constant 0 : i32
    return %c0_i32, %c0_i32_0 : i32, i32
  }
  func.func @transform_5(%arg0: i32) -> (i32, i32) {
    %c0_i32 = arith.constant 0 : i32
    %c0_i32_0 = arith.constant 0 : i32
    %c0_i32_1 = arith.constant 0 : i32
    return %c0_i32, %c0_i32_0 : i32, i32
  }
  func.func @transform_6(%arg0: i32) -> (i32, i32) {
    %c0_i32 = arith.constant 0 : i32
    %c0_i32_0 = arith.constant 0 : i32
    return %arg0, %c0_i32 : i32, i32
  }
}

</mosaic_0001>

<llo_original>
// kernel: generator_forward.1
$region0: #{generator_forward.1}
  #allocation0 [shape = 'u32[]', space=smem, size = 0x4, offset = 0x4, fixed_abs, tag = 'smem constant byte address 0x4 - core index']
  #allocation1 [shape = 'u32[144,128]{1,0:T(1,128)}', space=vmem, size = 0x12000, scoped, tag = 'internal scratch']
  %s0 = inlined_call_operand.vmem [shape: f32[8,128], index: 0, kind: input, shape index: {}]
  %s1 = inlined_call_operand.vmem [shape: bf16[128,128], index: 1, kind: input, shape index: {}]
  %s2 = inlined_call_operand.vmem [shape: bf16[128,128], index: 2, kind: input, shape index: {}]
  %s3 = inlined_call_operand.vmem [shape: bf16[128,128], index: 3, kind: input, shape index: {}]
  %s4 = inlined_call_operand.vmem [shape: f32[4,128], index: 4, kind: input, shape index: {}]
  %s5 = inlined_call_operand.vmem [shape: f32[2,128], index: 5, kind: input, shape index: {}]
  %s6 = inlined_call_operand.hbm [shape: f32[8,128], index: 6, kind: output, shape index: {}]
  %s7 = sld [smem:[#allocation0]]
  $region34: #{generator_forward.1} parent=0
    _
  %s9 = ssub.s32 1, %s7
  %s10 = scalar_select 0, %s9, %s7
  $region1: #{generator_forward.1} parent=0
    #allocation2 [shape = 'u8[4096]{0}', space=vmem, size = 0x1000, scoped, tag = 'output window, operand 0, single buffered']
    #allocation3 [shape = 's32[1]{0}', space=sflag, size = 0x4, scoped, tag = 'scoped memory for generator_forward.1']
    %11 = vsyncpa [#allocation3], 0
    // Predicated region
    $region2: #{generator_forward.1} parent=1 // pred_check
      _
    $region3: #{generator_forward.1} parent=1 // pred_check_branch
      %13 = sbr.rel (0) target = $region5
    $region4: #{generator_forward.1} parent=1 // pred_region
      _
    $region5: #{generator_forward.1} parent=1 // pred_fallthru
      _
    // Predicated region
    $region6: #{generator_forward.1} parent=1 // pred_check
      _
    $region7: #{generator_forward.1} parent=1 // pred_check_branch
      %15 = sbr.rel (0) target = $region9
    $region8: #{generator_forward.1} parent=1 // pred_region
      _
    $region9: #{generator_forward.1} parent=1 // pred_fallthru
      _
    // Predicated region
    $region10: #{generator_forward.1} parent=1 // pred_check
      _
    $region11: #{generator_forward.1} parent=1 // pred_check_branch
      %17 = sbr.rel (0) target = $region13
    $region12: #{generator_forward.1} parent=1 // pred_region
      _
    $region13: #{generator_forward.1} parent=1 // pred_fallthru
      _
    // Predicated region
    $region14: #{generator_forward.1} parent=1 // pred_check
      _
    $region15: #{generator_forward.1} parent=1 // pred_check_branch
      %19 = sbr.rel (0) target = $region17
    $region16: #{generator_forward.1} parent=1 // pred_region
      _
    $region17: #{generator_forward.1} parent=1 // pred_fallthru
      _
    // Predicated region
    $region18: #{generator_forward.1} parent=1 // pred_check
      _
    $region19: #{generator_forward.1} parent=1 // pred_check_branch
      %21 = sbr.rel (0) target = $region21
    $region20: #{generator_forward.1} parent=1 // pred_region
      _
    $region21: #{generator_forward.1} parent=1 // pred_fallthru
      _
    // Predicated region
    $region22: #{generator_forward.1} parent=1 // pred_check
      _
    $region23: #{generator_forward.1} parent=1 // pred_check_branch
      %23 = sbr.rel (0) target = $region25
    $region24: #{generator_forward.1} parent=1 // pred_region
      _
    $region25: #{generator_forward.1} parent=1 // pred_fallthru
      _
    %v25 = vld [vmem:[%s0] sm:$0xff]
    %v26 = vld [vmem:[%s4] sm:$0xf]
    %v27 = vld [vmem:[%s5] sm:$0x3]
    %v28 = vpack.c.bf16 %v25, %v25
    %v29 = vld [vmem:[%s1] sm:$0xf]
    %v30 = vld [vmem:[%s1 + $0x4] sm:$0xf]
    %v31 = vld [vmem:[%s1 + $0x8] sm:$0xf]
    %v32 = vld [vmem:[%s1 + $0xc] sm:$0xf]
    %v33 = vld [vmem:[%s1 + $0x10] sm:$0xf]
    %v34 = vld [vmem:[%s1 + $0x14] sm:$0xf]
    %v35 = vld [vmem:[%s1 + $0x18] sm:$0xf]
    %v36 = vld [vmem:[%s1 + $0x1c] sm:$0xf]
    %v37 = vld [vmem:[%s1 + $0x20] sm:$0xf]
    %v38 = vld [vmem:[%s1 + $0x24] sm:$0xf]
    %v39 = vld [vmem:[%s1 + $0x28] sm:$0xf]
    %v40 = vld [vmem:[%s1 + $0x2c] sm:$0xf]
    %v41 = vld [vmem:[%s1 + $0x30] sm:$0xf]
    %v42 = vld [vmem:[%s1 + $0x34] sm:$0xf]
    %v43 = vld [vmem:[%s1 + $0x38] sm:$0xf]
    %v44 = vld [vmem:[%s1 + $0x3c] sm:$0xf]
    %v61 = vunpack.c.l.b16 %v29
    %v62 = vunpack.c.l.b16 %v30
    %v63 = vunpack.c.l.b16 %v31
    %v64 = vunpack.c.l.b16 %v32
    %v65 = vunpack.c.l.b16 %v33
    %v66 = vunpack.c.l.b16 %v34
    %v67 = vunpack.c.l.b16 %v35
    %v68 = vunpack.c.l.b16 %v36
    %v69 = vunpack.c.l.b16 %v37
    %v70 = vunpack.c.l.b16 %v38
    %v71 = vunpack.c.l.b16 %v39
    %v72 = vunpack.c.l.b16 %v40
    %v73 = vunpack.c.l.b16 %v41
    %v74 = vunpack.c.l.b16 %v42
    %v75 = vunpack.c.l.b16 %v43
    %v76 = vunpack.c.l.b16 %v44
    %v77 = vpack.c.b16 %v62, %v61
    %v78 = vpack.c.b16 %v64, %v63
    %v79 = vpack.c.b16 %v66, %v65
    %v80 = vpack.c.b16 %v68, %v67
    %v81 = vpack.c.b16 %v70, %v69
    %v82 = vpack.c.b16 %v72, %v71
    %v83 = vpack.c.b16 %v74, %v73
    %v84 = vpack.c.b16 %v76, %v75
    %93 = vmatprep.subr.bf16.mxu0 0
    %94 = vmatpush1.bf16.msra.mxu0 %v84
    %95 = vmatprep.subr.bf16.mxu0 0
    %96 = vmatpush1.bf16.msra.mxu0 %v83
    %97 = vmatprep.subr.bf16.mxu0 0
    %98 = vmatpush1.bf16.msra.mxu0 %v82
    %99 = vmatprep.subr.bf16.mxu0 0
    %100 = vmatpush1.bf16.msra.mxu0 %v81
    %101 = vmatprep.subr.bf16.mxu0 0
    %102 = vmatpush1.bf16.msra.mxu0 %v80
    %103 = vmatprep.subr.bf16.mxu0 0
    %104 = vmatpush1.bf16.msra.mxu0 %v79
    %105 = vmatprep.subr.bf16.mxu0 0
    %106 = vmatpush1.bf16.msra.mxu0 %v78
    %107 = vmatprep.subr.bf16.mxu0 0
    %108 = vmatpush1.bf16.msra.mxu0 %v77
    %109 = vmatprep.subr.bf16.mxu0 0
    %110 = vmatpush2.bf16.msra.mxu0 0
    %111 = vmatprep.subr.bf16.mxu0 0
    %112 = vmatpush2.bf16.msra.mxu0 0
    %113 = vmatprep.subr.bf16.mxu0 0
    %114 = vmatpush2.bf16.msra.mxu0 0
    %115 = vmatprep.subr.bf16.mxu0 0
    %116 = vmatpush2.bf16.msra.mxu0 0
    %117 = vmatprep.subr.bf16.mxu0 0
    %118 = vmatpush2.bf16.msra.mxu0 0
    %119 = vmatprep.subr.bf16.mxu0 0
    %120 = vmatpush2.bf16.msra.mxu0 0
    %121 = vmatprep.subr.bf16.mxu0 0
    %122 = vmatpush2.bf16.msra.mxu0 0
    %123 = vmatprep.subr.bf16.mxu0 0
    %124 = vmatpush2.bf16.msra.mxu0 0
    %125 = vmatprep.mubr.bf16.mxu0 0
    %126 = vmatmul.mubr.bf16.gmra.mxu0 %v28
    %v127 = vpop.f32.mrf.mxu0
    %v128 = vadd.f32 0.0, %v127
    %v129 = vpop.f32.mrf.mxu0
    %v130 = vpop.f32.mrf.mxu0
    %v131 = vpop.f32.mrf.mxu0
    %132 = vdwg.mxu0
    %133 = vadd.xlane.f32.xlu0 %v128
    %v134 = vpop.xlane.xlu0 %133
    %v135 = vmul.f32 %v128, %v128
    %136 = vadd.xlane.f32.xlu0 %v135
    %v137 = vpop.xlane.xlu0 %136
    %v138 = vmul.f32 %v134, 0.03125
    %v139 = vmul.f32 %v137, 0.03125
    %v140 = vmul.f32 %v138, %v138
    %v141 = vsub.f32 %v139, %v140
    %v142 = vmax.f32 %v141, 0.0
    %v143 = vsub.f32 %v128, %v138
    %v144 = vadd.f32 %v142, 1e-05
    %v145 = vrsqrt.pop %v144
    %v146 = vmul.f32 %v143, %v145
    %v147 = vlaneseq
    %v148 = vshrl.u32 %v147, 7
    %v149 = vsub.s32 0, %v148
    %v150 = vrot.slane %v26, %v149
    %v151 = vmul.f32 %v146, %v150
    %v152 = vlaneseq
    %v153 = vshrl.u32 %v152, 7
    %v154 = vsub.s32 1, %v153
    %v155 = vrot.slane %v26, %v154
    %v156 = vadd.f32 %v151, %v155
    %v157 = vtanh.pop %v156
    %v158 = vadd.f32 %v157, %v25
    %v159 = vpack.c.bf16 %v158, %v158
    %v160 = vld [vmem:[%s2] sm:$0xf]
    %v161 = vld [vmem:[%s2 + $0x4] sm:$0xf]
    %v162 = vld [vmem:[%s2 + $0x8] sm:$0xf]
    %v163 = vld [vmem:[%s2 + $0xc] sm:$0xf]
    %v164 = vld [vmem:[%s2 + $0x10] sm:$0xf]
    %v165 = vld [vmem:[%s2 + $0x14] sm:$0xf]
    %v166 = vld [vmem:[%s2 + $0x18] sm:$0xf]
    %v167 = vld [vmem:[%s2 + $0x1c] sm:$0xf]
    %v168 = vld [vmem:[%s2 + $0x20] sm:$0xf]
    %v169 = vld [vmem:[%s2 + $0x24] sm:$0xf]
    %v170 = vld [vmem:[%s2 + $0x28] sm:$0xf]
    %v171 = vld [vmem:[%s2 + $0x2c] sm:$0xf]
    %v172 = vld [vmem:[%s2 + $0x30] sm:$0xf]
    %v173 = vld [vmem:[%s2 + $0x34] sm:$0xf]
    %v174 = vld [vmem:[%s2 + $0x38] sm:$0xf]
    %v175 = vld [vmem:[%s2 + $0x3c] sm:$0xf]
    %v192 = vunpack.c.l.b16 %v160
    %v193 = vunpack.c.l.b16 %v161
    %v194 = vunpack.c.l.b16 %v162
    %v195 = vunpack.c.l.b16 %v163
    %v196 = vunpack.c.l.b16 %v164
    %v197 = vunpack.c.l.b16 %v165
    %v198 = vunpack.c.l.b16 %v166
    %v199 = vunpack.c.l.b16 %v167
    %v200 = vunpack.c.l.b16 %v168
    %v201 = vunpack.c.l.b16 %v169
    %v202 = vunpack.c.l.b16 %v170
    %v203 = vunpack.c.l.b16 %v171
    %v204 = vunpack.c.l.b16 %v172
    %v205 = vunpack.c.l.b16 %v173
    %v206 = vunpack.c.l.b16 %v174
    %v207 = vunpack.c.l.b16 %v175
    %v208 = vpack.c.b16 %v193, %v192
    %v209 = vpack.c.b16 %v195, %v194
    %v210 = vpack.c.b16 %v197, %v196
    %v211 = vpack.c.b16 %v199, %v198
    %v212 = vpack.c.b16 %v201, %v200
    %v213 = vpack.c.b16 %v203, %v202
    %v214 = vpack.c.b16 %v205, %v204
    %v215 = vpack.c.b16 %v207, %v206
    %224 = vmatprep.subr.bf16.mxu0 0
    %225 = vmatpush1.bf16.msra.mxu0 %v215
    %226 = vmatprep.subr.bf16.mxu0 0
    %227 = vmatpush1.bf16.msra.mxu0 %v214
    %228 = vmatprep.subr.bf16.mxu0 0
    %229 = vmatpush1.bf16.msra.mxu0 %v213
    %230 = vmatprep.subr.bf16.mxu0 0
    %231 = vmatpush1.bf16.msra.mxu0 %v212
    %232 = vmatprep.subr.bf16.mxu0 0
    %233 = vmatpush1.bf16.msra.mxu0 %v211
    %234 = vmatprep.subr.bf16.mxu0 0
    %235 = vmatpush1.bf16.msra.mxu0 %v210
    %236 = vmatprep.subr.bf16.mxu0 0
    %237 = vmatpush1.bf16.msra.mxu0 %v209
    %238 = vmatprep.subr.bf16.mxu0 0
    %239 = vmatpush1.bf16.msra.mxu0 %v208
    %240 = vmatprep.subr.bf16.mxu0 0
    %241 = vmatpush2.bf16.msra.mxu0 0
    %242 = vmatprep.subr.bf16.mxu0 0
    %243 = vmatpush2.bf16.msra.mxu0 0
    %244 = vmatprep.subr.bf16.mxu0 0
    %245 = vmatpush2.bf16.msra.mxu0 0
    %246 = vmatprep.subr.bf16.mxu0 0
    %247 = vmatpush2.bf16.msra.mxu0 0
    %248 = vmatprep.subr.bf16.mxu0 0
    %249 = vmatpush2.bf16.msra.mxu0 0
    %250 = vmatprep.subr.bf16.mxu0 0
    %251 = vmatpush2.bf16.msra.mxu0 0
    %252 = vmatprep.subr.bf16.mxu0 0
    %253 = vmatpush2.bf16.msra.mxu0 0
    %254 = vmatprep.subr.bf16.mxu0 0
    %255 = vmatpush2.bf16.msra.mxu0 0
    %256 = vmatprep.mubr.bf16.mxu0 0
    %257 = vmatmul.mubr.bf16.gmra.mxu0 %v159
    %v258 = vpop.f32.mrf.mxu0
    %v259 = vadd.f32 0.0, %v258
    %v260 = vpop.f32.mrf.mxu0
    %v261 = vpop.f32.mrf.mxu0
    %v262 = vpop.f32.mrf.mxu0
    %263 = vdwg.mxu0
    %264 = vadd.xlane.f32.xlu0 %v259
    %v265 = vpop.xlane.xlu0 %264
    %v266 = vmul.f32 %v259, %v259
    %267 = vadd.xlane.f32.xlu0 %v266
    %v268 = vpop.xlane.xlu0 %267
    %v269 = vmul.f32 %v265, 0.03125
    %v270 = vmul.f32 %v268, 0.03125
    %v271 = vmul.f32 %v269, %v269
    %v272 = vsub.f32 %v270, %v271
    %v273 = vmax.f32 %v272, 0.0
    %v274 = vsub.f32 %v259, %v269
    %v275 = vadd.f32 %v273, 1e-05
    %v276 = vrsqrt.pop %v275
    %v277 = vmul.f32 %v274, %v276
    %v278 = vlaneseq
    %v279 = vshrl.u32 %v278, 7
    %v280 = vsub.s32 2, %v279
    %v281 = vrot.slane %v26, %v280
    %v282 = vmul.f32 %v277, %v281
    %v283 = vlaneseq
    %v284 = vshrl.u32 %v283, 7
    %v285 = vsub.s32 3, %v284
    %v286 = vrot.slane %v26, %v285
    %v287 = vadd.f32 %v282, %v286
    %v288 = vtanh.pop %v287
    %v289 = vadd.f32 %v288, %v158
    %v290 = vpack.c.bf16 %v289, %v289
    %v291 = vld [vmem:[%s3] sm:$0xf]
    %v292 = vld [vmem:[%s3 + $0x4] sm:$0xf]
    %v293 = vld [vmem:[%s3 + $0x8] sm:$0xf]
    %v294 = vld [vmem:[%s3 + $0xc] sm:$0xf]
    %v295 = vld [vmem:[%s3 + $0x10] sm:$0xf]
    %v296 = vld [vmem:[%s3 + $0x14] sm:$0xf]
    %v297 = vld [vmem:[%s3 + $0x18] sm:$0xf]
    %v298 = vld [vmem:[%s3 + $0x1c] sm:$0xf]
    %v299 = vld [vmem:[%s3 + $0x20] sm:$0xf]
    %v300 = vld [vmem:[%s3 + $0x24] sm:$0xf]
    %v301 = vld [vmem:[%s3 + $0x28] sm:$0xf]
    %v302 = vld [vmem:[%s3 + $0x2c] sm:$0xf]
    %v303 = vld [vmem:[%s3 + $0x30] sm:$0xf]
    %v304 = vld [vmem:[%s3 + $0x34] sm:$0xf]
    %v305 = vld [vmem:[%s3 + $0x38] sm:$0xf]
    %v306 = vld [vmem:[%s3 + $0x3c] sm:$0xf]
    %v323 = vunpack.c.l.b16 %v291
    %v324 = vunpack.c.l.b16 %v292
    %v325 = vunpack.c.l.b16 %v293
    %v326 = vunpack.c.l.b16 %v294
    %v327 = vunpack.c.l.b16 %v295
    %v328 = vunpack.c.l.b16 %v296
    %v329 = vunpack.c.l.b16 %v297
    %v330 = vunpack.c.l.b16 %v298
    %v331 = vunpack.c.l.b16 %v299
    %v332 = vunpack.c.l.b16 %v300
    %v333 = vunpack.c.l.b16 %v301
    %v334 = vunpack.c.l.b16 %v302
    %v335 = vunpack.c.l.b16 %v303
    %v336 = vunpack.c.l.b16 %v304
    %v337 = vunpack.c.l.b16 %v305
    %v338 = vunpack.c.l.b16 %v306
    %v339 = vpack.c.b16 %v324, %v323
    %v340 = vpack.c.b16 %v326, %v325
    %v341 = vpack.c.b16 %v328, %v327
    %v342 = vpack.c.b16 %v330, %v329
    %v343 = vpack.c.b16 %v332, %v331
    %v344 = vpack.c.b16 %v334, %v333
    %v345 = vpack.c.b16 %v336, %v335
    %v346 = vpack.c.b16 %v338, %v337
    %355 = vmatprep.subr.bf16.mxu0 0
    %356 = vmatpush1.bf16.msra.mxu0 %v346
    %357 = vmatprep.subr.bf16.mxu0 0
    %358 = vmatpush1.bf16.msra.mxu0 %v345
    %359 = vmatprep.subr.bf16.mxu0 0
    %360 = vmatpush1.bf16.msra.mxu0 %v344
    %361 = vmatprep.subr.bf16.mxu0 0
    %362 = vmatpush1.bf16.msra.mxu0 %v343
    %363 = vmatprep.subr.bf16.mxu0 0
    %364 = vmatpush1.bf16.msra.mxu0 %v342
    %365 = vmatprep.subr.bf16.mxu0 0
    %366 = vmatpush1.bf16.msra.mxu0 %v341
    %367 = vmatprep.subr.bf16.mxu0 0
    %368 = vmatpush1.bf16.msra.mxu0 %v340
    %369 = vmatprep.subr.bf16.mxu0 0
    %370 = vmatpush1.bf16.msra.mxu0 %v339
    %371 = vmatprep.subr.bf16.mxu0 0
    %372 = vmatpush2.bf16.msra.mxu0 0
    %373 = vmatprep.subr.bf16.mxu0 0
    %374 = vmatpush2.bf16.msra.mxu0 0
    %375 = vmatprep.subr.bf16.mxu0 0
    %376 = vmatpush2.bf16.msra.mxu0 0
    %377 = vmatprep.subr.bf16.mxu0 0
    %378 = vmatpush2.bf16.msra.mxu0 0
    %379 = vmatprep.subr.bf16.mxu0 0
    %380 = vmatpush2.bf16.msra.mxu0 0
    %381 = vmatprep.subr.bf16.mxu0 0
    %382 = vmatpush2.bf16.msra.mxu0 0
    %383 = vmatprep.subr.bf16.mxu0 0
    %384 = vmatpush2.bf16.msra.mxu0 0
    %385 = vmatprep.subr.bf16.mxu0 0
    %386 = vmatpush2.bf16.msra.mxu0 0
    %387 = vmatprep.mubr.bf16.mxu0 0
    %388 = vmatmul.mubr.bf16.gmra.mxu0 %v290
    %v389 = vpop.f32.mrf.mxu0
    %v390 = vadd.f32 0.0, %v389
    %v391 = vpop.f32.mrf.mxu0
    %v392 = vpop.f32.mrf.mxu0
    %v393 = vpop.f32.mrf.mxu0
    %394 = vdwg.mxu0
    %395 = vadd.xlane.f32.xlu0 %v390
    %v396 = vpop.xlane.xlu0 %395
    %v397 = vmul.f32 %v390, %v390
    %398 = vadd.xlane.f32.xlu0 %v397
    %v399 = vpop.xlane.xlu0 %398
    %v400 = vmul.f32 %v396, 0.0625
    %v401 = vmul.f32 %v399, 0.0625
    %v402 = vmul.f32 %v400, %v400
    %v403 = vsub.f32 %v401, %v402
    %v404 = vmax.f32 %v403, 0.0
    %v405 = vsub.f32 %v390, %v400
    %v406 = vadd.f32 %v404, 1e-05
    %v407 = vrsqrt.pop %v406
    %v408 = vmul.f32 %v405, %v407
    %v409 = vlaneseq
    %v410 = vshrl.u32 %v409, 7
    %v411 = vsub.s32 0, %v410
    %v412 = vrot.slane %v27, %v411
    %v413 = vmul.f32 %v408, %v412
    %v414 = vlaneseq
    %v415 = vshrl.u32 %v414, 7
    %v416 = vsub.s32 1, %v415
    %v417 = vrot.slane %v27, %v416
    %v418 = vadd.f32 %v413, %v417
    %v419 = vtanh.pop %v418
    %420 = vst [vmem:[#allocation2] sm:$0xff] %v419
    // Predicated region
    $region26: #{generator_forward.1} parent=1 // pred_check
      _
    $region27: #{generator_forward.1} parent=1 // pred_check_branch
      %422 = sbr.rel (0) target = $region29
    $region28: #{generator_forward.1} parent=1 // pred_region
      %s424 = ssub.s32 128, 128
      %425 = vsyncadd [#allocation3], %s424
      %s427 = sshll.u32 [#allocation2], 4
      %s428 = int_to_ptr.vmem [resolvable:$true] %s427
      %430 = dma.vmem_to_hbm [thread:$0]  %s428, 128, %s6, [#allocation3]
    $region29: #{generator_forward.1} parent=1 // pred_fallthru
      _
    // Predicated region
    $region30: #{generator_forward.1} parent=1 // pred_check
      _
    $region31: #{generator_forward.1} parent=1 // pred_check_branch
      %432 = sbr.rel (0) target = $region33
    $region32: #{generator_forward.1} parent=1 // pred_region
      %433 = dma.done [#allocation3], 128
    $region33: #{generator_forward.1} parent=1 // pred_fallthru
      _
    %434 = vsyncpa [#allocation3], 1

</llo_original>
